<compile_context>
chip_gen: v6e
topology: v6e:2x2x1
jax: 0.10.0
libtpu: 0.0.40
codegen_flags: <defaults>
</compile_context>

<pallas_src>
import functools
import math

import jax
import jax.numpy as jnp
from jax.experimental import pallas as pl
from jax.experimental.pallas import tpu as pltpu

_INV_SQRT2 = 1.0 / math.sqrt(2.0)


def _gelu_ln(h, gamma, beta, eps):
    """erf-GELU followed by TF-style LayerNorm over the last axis (all in f32)."""
    # TODO(synk): optional bf16 elementwise epilogue (v6e/v7x bf16 VALU); kept f32 for accuracy.
    h = h * 0.5 * (1.0 + jax.lax.erf(h * _INV_SQRT2))
    u = jnp.mean(h, axis=-1, keepdims=True)
    d = h - u
    s = jnp.mean(d * d, axis=-1, keepdims=True)
    inv = jax.lax.rsqrt(s + eps)          # per-row stats -> EUP; avoids a full-tile divide
    return gamma * (d * inv) + beta


def _kernel_full_weight(x_ref, w_ref, b_ref, g_ref, bt_ref, o_ref, *, eps, mxu_dtype):
    # x_ref: (tm, H) row tile; w_ref: (H, H) pre-transposed [in, out] weight in mxu_dtype;
    # b/g/bt: (1, H) f32; o_ref: (tm, H).
    x = x_ref[...]
    if x.dtype != mxu_dtype:
        x = x.astype(mxu_dtype)
    h = jnp.dot(x, w_ref[...], preferred_element_type=jnp.float32) + b_ref[...]
    o_ref[...] = _gelu_ln(h, g_ref[...], bt_ref[...], eps).astype(o_ref.dtype)


def _kernel_col_tiled(x_ref, w_ref, b_ref, g_ref, bt_ref, o_ref, acc_ref, *, eps, mxu_dtype, tn):
    # Column-tiled weight path (large H / v7x): grid = (rows, cols).
    # acc_ref is a resident (tm, H) f32 scratch holding the dense output for the row tile.
    j = pl.program_id(1)
    x = x_ref[...]
    if x.dtype != mxu_dtype:
        x = x.astype(mxu_dtype)
    h = jnp.dot(x, w_ref[...], preferred_element_type=jnp.float32) + b_ref[...]
    col0 = pl.multiple_of(j * tn, 128)
    acc_ref[:, pl.ds(col0, tn)] = h

    @pl.when(j == pl.num_programs(1) - 1)
    def _():
        o_ref[...] = _gelu_ln(acc_ref[...], g_ref[...], bt_ref[...], eps).astype(o_ref.dtype)


def _round_up(a, m):
    return ((a + m - 1) // m) * m


def _vmem_budget_bytes():
    """Generation-aware VMEM budget (headroom below per-core physical capacity)."""
    try:
        cap = int(pltpu.get_tpu_info().vmem_capacity_bytes)
    except Exception:
        cap = 64 << 20                       # conservative fallback (v7x per-TensorCore)
    return min(int(cap * 0.78), cap - (12 << 20))


def bert_img_prediction_head_transform(x, w, b, gamma, beta, *, eps=1e-12, tm=512, tn=None,
                                       mxu_dtype=jnp.bfloat16):
    """BertImgPredictionHeadTransform forward.

    x: [..., H]; w: [H, H] PyTorch Linear weight ([out, in]); b, gamma, beta: [H].
    mxu_dtype: matmul operand dtype (bf16 default for MXU peak; pass jnp.float32 for exact
               f32 matmul semantics).  Accumulation is always f32.
    tn: optional weight column tile (multiple of 128 dividing H); None = auto.
    """
    orig_shape = x.shape
    H = orig_shape[-1]
    x2 = x.reshape(-1, H)
    M = x2.shape[0]
    out_dtype = x.dtype
    mxu_dtype = jnp.dtype(mxu_dtype)

    # One-time prep outside pallas_call: weight -> [in, out] in the MXU dtype, params -> f32.
    wT = w.T.astype(mxu_dtype)
    b2 = b.reshape(1, H).astype(jnp.float32)
    g2 = gamma.reshape(1, H).astype(jnp.float32)
    bt2 = beta.reshape(1, H).astype(jnp.float32)

    # ---- tile sizing -------------------------------------------------------------------
    x_pack = 16 if jnp.dtype(x.dtype).itemsize <= 2 else 8     # sublane pack of x's dtype
    tm_eff = max(x_pack, min(_round_up(tm, x_pack), _round_up(M, x_pack)))
    # v7x megacore: keep >= 2 row steps so the "parallel" axis can shard across both TCs.
    if pl.cdiv(M, tm_eff) < 2 and tm_eff > x_pack:
        tm_eff = max(x_pack, _round_up(pl.cdiv(M, 2), x_pack))

    # Weight column tile (only when it fits cleanly: multiple of 128 that divides H).
    if tn is not None and 0 < tn < H and H % tn == 0 and tn % 128 == 0:
        tn_eff = int(tn)
    else:
        tn_eff = H

    x_bytes = jnp.dtype(x.dtype).itemsize
    o_bytes = jnp.dtype(out_dtype).itemsize

    def resident_bytes(tm_, tn_):
        ncol = pl.cdiv(H, tn_)
        r = (1 if ncol == 1 else 2) * H * tn_ * mxu_dtype.itemsize   # weight slab(s)
        r += 2 * tm_ * H * x_bytes                                   # x tile, double-buffered
        r += 2 * tm_ * H * o_bytes                                   # out tile, double-buffered
        r += 3 * 2 * H * 4                                           # bias / gamma / beta
        if ncol > 1:
            r += tm_ * H * 4                                         # resident f32 accumulator
        r += 4 * tm_ * H * 4                                         # f32 intermediates headroom
        return r

    budget = _vmem_budget_bytes()
    tm_floor = max(x_pack, min(tm_eff, 128))
    while resident_bytes(tm_eff, tn_eff) > budget and tm_eff > tm_floor:
        tm_eff = max(tm_floor, _round_up(tm_eff // 2, x_pack))
    if resident_bytes(tm_eff, tn_eff) > budget and tn_eff == H and H % 128 == 0:
        for cand in range(H - 128, 0, -128):          # largest divisor of H first
            if H % cand == 0:
                tn_eff = cand
                if resident_bytes(tm_eff, tn_eff) <= budget:
                    break

    n_rows = pl.cdiv(M, tm_eff)
    n_col = pl.cdiv(H, tn_eff)
    vmem_limit = int(min(max(resident_bytes(tm_eff, tn_eff) + (8 << 20), 32 << 20), budget))

    cost = pl.CostEstimate(
        flops=2 * M * H * H + 12 * M * H,
        transcendentals=2 * M * H,
        bytes_accessed=M * H * (x_bytes + o_bytes) + H * H * mxu_dtype.itemsize + 3 * H * 4,
    )

    if n_col == 1:
        kernel = functools.partial(_kernel_full_weight, eps=eps, mxu_dtype=mxu_dtype)
        grid_spec = pltpu.PrefetchScalarGridSpec(
            num_scalar_prefetch=0,
            grid=(n_rows,),
            in_specs=[
                pl.BlockSpec((tm_eff, H), lambda i: (i, 0)),                               # x rows
                pl.BlockSpec((H, H), lambda i: (0, 0), pipeline_mode=pl.Buffered(1)),      # weight
                pl.BlockSpec((1, H), lambda i: (0, 0), pipeline_mode=pl.Buffered(1)),      # bias
                pl.BlockSpec((1, H), lambda i: (0, 0), pipeline_mode=pl.Buffered(1)),      # gamma
                pl.BlockSpec((1, H), lambda i: (0, 0), pipeline_mode=pl.Buffered(1)),      # beta
            ],
            out_specs=pl.BlockSpec((tm_eff, H), lambda i: (i, 0)),
        )
        dims = ("parallel",)
    else:
        kernel = functools.partial(_kernel_col_tiled, eps=eps, mxu_dtype=mxu_dtype, tn=tn_eff)
        grid_spec = pltpu.PrefetchScalarGridSpec(
            num_scalar_prefetch=0,
            grid=(n_rows, n_col),
            in_specs=[
                pl.BlockSpec((tm_eff, H), lambda i, j: (i, 0)),                            # x rows
                pl.BlockSpec((H, tn_eff), lambda i, j: (0, j)),                            # weight cols
                pl.BlockSpec((1, tn_eff), lambda i, j: (0, j)),                            # bias cols
                pl.BlockSpec((1, H), lambda i, j: (0, 0), pipeline_mode=pl.Buffered(1)),   # gamma
                pl.BlockSpec((1, H), lambda i, j: (0, 0), pipeline_mode=pl.Buffered(1)),   # beta
            ],
            out_specs=pl.BlockSpec((tm_eff, H), lambda i, j: (i, 0)),
            scratch_shapes=[pltpu.VMEM((tm_eff, H), jnp.float32)],
        )
        dims = ("parallel", "arbitrary")

    out = pl.pallas_call(
        kernel,
        out_shape=jax.ShapeDtypeStruct((M, H), out_dtype),
        grid_spec=grid_spec,
        compiler_params=pltpu.CompilerParams(
            dimension_semantics=dims,
            vmem_limit_bytes=vmem_limit,
        ),
        cost_estimate=cost,
    )(x2, wT, b2, g2, bt2)

    return out.reshape(orig_shape)


def _reference(x, w, b, gamma, beta, eps=1e-12):
    h = jnp.einsum("...i,oi->...o", x, w) + b
    h = h * 0.5 * (1.0 + jax.lax.erf(h / math.sqrt(2.0)))
    u = jnp.mean(h, axis=-1, keepdims=True)
    s = jnp.mean((h - u) ** 2, axis=-1, keepdims=True)
    return gamma * ((h - u) / jnp.sqrt(s + eps)) + beta


if __name__ == "__main__":
    key = jax.random.PRNGKey(0)
    B, S, H = 2, 8, 32  # batch, seq, v_hidden_size (small demo shapes)

    k1, k2, k3 = jax.random.split(key, 3)
    x = jax.random.normal(k1, (B, S, H), dtype=jnp.float32)
    w = jax.random.normal(k2, (H, H), dtype=jnp.float32) * (1.0 / math.sqrt(H))
    b = jax.random.normal(k3, (H,), dtype=jnp.float32) * 0.02
    gamma = jnp.ones((H,), dtype=jnp.float32)   # BertLayerNorm weight init
    beta = jnp.zeros((H,), dtype=jnp.float32)   # BertLayerNorm bias init

    out = bert_img_prediction_head_transform(x, w, b, gamma, beta)
    jax.block_until_ready(out)
    assert out.shape == (B, S, H)

    # Tight check vs a reference using the same bf16-rounded matmul operands (f32 accumulation),
    # loose check vs the pure-f32 reference (bf16 operand rounding is the only difference).
    ref_bf16 = _reference(x.astype(jnp.bfloat16).astype(jnp.float32),
                          w.astype(jnp.bfloat16).astype(jnp.float32), b, gamma, beta)
    ref_f32 = _reference(x, w, b, gamma, beta)
    assert jnp.allclose(out, ref_bf16, atol=2e-3, rtol=2e-3), "mismatch vs bf16-operand reference"
    assert jnp.allclose(out, ref_f32, atol=5e-2, rtol=5e-2), "mismatch vs f32 reference"

    # Exercise the column-tiled weight path (v7x / large-H fallback) at a small shape.
    H2, M2 = 256, 32
    kk = jax.random.split(jax.random.PRNGKey(1), 3)
    xa = jax.random.normal(kk[0], (M2, H2), dtype=jnp.float32)
    wa = jax.random.normal(kk[1], (H2, H2), dtype=jnp.float32) * (1.0 / math.sqrt(H2))
    ba = jax.random.normal(kk[2], (H2,), dtype=jnp.float32) * 0.02
    ga = jnp.ones((H2,), dtype=jnp.float32)
    ta = jnp.zeros((H2,), dtype=jnp.float32)

    out2 = bert_img_prediction_head_transform(xa, wa, ba, ga, ta, tn=128)
    jax.block_until_ready(out2)
    ref2 = _reference(xa.astype(jnp.bfloat16).astype(jnp.float32),
                      wa.astype(jnp.bfloat16).astype(jnp.float32), ba, ga, ta)
    assert out2.shape == (M2, H2)
    assert jnp.allclose(out2, ref2, atol=3e-3, rtol=3e-3), "mismatch (column-tiled path)"

    print("KERNEL_OK")
</pallas_src>

<mosaic_0001>
module attributes {stable_mosaic.version = 11 : i64} {
  func.func @_kernel_full_weight(%arg0: i32, %arg1: memref<8x32xf32, #tpu.memory_space<vmem>>, %arg2: memref<32x32xbf16, #tpu.memory_space<vmem>>, %arg3: memref<1x32xf32, #tpu.memory_space<vmem>>, %arg4: memref<1x32xf32, #tpu.memory_space<vmem>>, %arg5: memref<1x32xf32, #tpu.memory_space<vmem>>, %arg6: memref<8x32xf32, #tpu.memory_space<vmem>>) attributes {dimension_semantics = [#tpu.dimension_semantics<parallel>], iteration_bounds = array<i64: 2>, scalar_prefetch = 0 : i64, scratch_operands = 0 : i64, tpu.core_type = #tpu.core_type<tc>, window_params = [{transform_indices = @transform_0, window_bounds = array<i64: 8, 32>}, {pipeline_mode = #tpu.pipeline_mode<synchronous>, transform_indices = @transform_1, window_bounds = array<i64: 32, 32>}, {pipeline_mode = #tpu.pipeline_mode<synchronous>, transform_indices = @transform_2, window_bounds = array<i64: 1, 32>}, {pipeline_mode = #tpu.pipeline_mode<synchronous>, transform_indices = @transform_3, window_bounds = array<i64: 1, 32>}, {pipeline_mode = #tpu.pipeline_mode<synchronous>, transform_indices = @transform_4, window_bounds = array<i64: 1, 32>}, {transform_indices = @transform_5, window_bounds = array<i64: 8, 32>}]} {
    %c0 = arith.constant 0 : index
    %c0_0 = arith.constant 0 : index
    %0 = vector.load %arg1[%c0, %c0_0] : memref<8x32xf32, #tpu.memory_space<vmem>>, vector<8x32xf32>
    %1 = arith.truncf %0 : vector<8x32xf32> to vector<8x32xbf16>
    %c0_1 = arith.constant 0 : index
    %c0_2 = arith.constant 0 : index
    %2 = vector.load %arg2[%c0_1, %c0_2] : memref<32x32xbf16, #tpu.memory_space<vmem>>, vector<32x32xbf16>
    %cst = arith.constant dense<0.000000e+00> : vector<8x32xf32>
    %3 = tpu.matmul %1, %2, %cst {dimension_numbers = #tpu.dot_dimension_numbers<[1], [0], [0], [1], [0, 0, 1, 1], [], []>} : vector<8x32xbf16>, vector<32x32xbf16>, vector<8x32xf32> -> vector<8x32xf32>
    %c0_3 = arith.constant 0 : index
    %c0_4 = arith.constant 0 : index
    %4 = vector.load %arg3[%c0_3, %c0_4] : memref<1x32xf32, #tpu.memory_space<vmem>>, vector<1x32xf32>
    %5 = vector.broadcast %4 : vector<1x32xf32> to vector<8x32xf32>
    %6 = arith.addf %3, %5 : vector<8x32xf32>
    %c0_5 = arith.constant 0 : index
    %c0_6 = arith.constant 0 : index
    %7 = vector.load %arg4[%c0_5, %c0_6] : memref<1x32xf32, #tpu.memory_space<vmem>>, vector<1x32xf32>
    %c0_7 = arith.constant 0 : index
    %c0_8 = arith.constant 0 : index
    %8 = vector.load %arg5[%c0_7, %c0_8] : memref<1x32xf32, #tpu.memory_space<vmem>>, vector<1x32xf32>
    %cst_9 = arith.constant 5.000000e-01 : f32
    %9 = vector.broadcast %cst_9 : f32 to vector<8x32xf32>
    %10 = arith.mulf %6, %9 : vector<8x32xf32>
    %cst_10 = arith.constant 0.707106769 : f32
    %11 = vector.broadcast %cst_10 : f32 to vector<8x32xf32>
    %12 = arith.mulf %6, %11 : vector<8x32xf32>
    %13 = math.erf %12 : vector<8x32xf32>
    %cst_11 = arith.constant 1.000000e+00 : f32
    %14 = vector.broadcast %cst_11 : f32 to vector<8x32xf32>
    %15 = arith.addf %14, %13 : vector<8x32xf32>
    %16 = arith.mulf %10, %15 : vector<8x32xf32>
    %cst_12 = arith.constant dense<0.000000e+00> : vector<8xf32>
    %17 = vector.multi_reduction <add>, %16, %cst_12 [1] : vector<8x32xf32> to vector<8xf32>
    %18 = vector.shape_cast %17 : vector<8xf32> to vector<8x1xf32>
    %cst_13 = arith.constant 3.200000e+01 : f32
    %19 = vector.broadcast %cst_13 : f32 to vector<8x1xf32>
    %20 = arith.divf %18, %19 : vector<8x1xf32>
    %21 = vector.broadcast %20 : vector<8x1xf32> to vector<8x32xf32>
    %22 = arith.subf %16, %21 : vector<8x32xf32>
    %23 = arith.mulf %22, %22 : vector<8x32xf32>
    %cst_14 = arith.constant dense<0.000000e+00> : vector<8xf32>
    %24 = vector.multi_reduction <add>, %23, %cst_14 [1] : vector<8x32xf32> to vector<8xf32>
    %25 = vector.shape_cast %24 : vector<8xf32> to vector<8x1xf32>
    %cst_15 = arith.constant 3.200000e+01 : f32
    %26 = vector.broadcast %cst_15 : f32 to vector<8x1xf32>
    %27 = arith.divf %25, %26 : vector<8x1xf32>
    %cst_16 = arith.constant 9.99999996E-13 : f32
    %28 = vector.broadcast %cst_16 : f32 to vector<8x1xf32>
    %29 = arith.addf %27, %28 : vector<8x1xf32>
    %30 = math.rsqrt %29 : vector<8x1xf32>
    %31 = vector.broadcast %30 : vector<8x1xf32> to vector<8x32xf32>
    %32 = arith.mulf %22, %31 : vector<8x32xf32>
    %33 = vector.broadcast %7 : vector<1x32xf32> to vector<8x32xf32>
    %34 = arith.mulf %33, %32 : vector<8x32xf32>
    %35 = vector.broadcast %8 : vector<1x32xf32> to vector<8x32xf32>
    %36 = arith.addf %34, %35 : vector<8x32xf32>
    %c0_17 = arith.constant 0 : index
    %c0_18 = arith.constant 0 : index
    %37 = vector.load %arg6[%c0_17, %c0_18] : memref<8x32xf32, #tpu.memory_space<vmem>>, vector<8x32xf32>
    tpu.vector_store %arg6[%c0_17, %c0_18], %36 {strides = array<i32>} : memref<8x32xf32, #tpu.memory_space<vmem>>, vector<8x32xf32>,
    return
  }
  func.func @transform_0(%arg0: i32) -> (i32, i32) {
    %c0_i32 = arith.constant 0 : i32
    %c0_i32_0 = arith.constant 0 : i32
    return %arg0, %c0_i32 : i32, i32
  }
  func.func @transform_1(%arg0: i32) -> (i32, i32) {
    %c0_i32 = arith.constant 0 : i32
    %c0_i32_0 = arith.constant 0 : i32
    %c0_i32_1 = arith.constant 0 : i32
    return %c0_i32, %c0_i32_0 : i32, i32
  }
  func.func @transform_2(%arg0: i32) -> (i32, i32) {
    %c0_i32 = arith.constant 0 : i32
    %c0_i32_0 = arith.constant 0 : i32
    %c0_i32_1 = arith.constant 0 : i32
    return %c0_i32, %c0_i32_0 : i32, i32
  }
  func.func @transform_3(%arg0: i32) -> (i32, i32) {
    %c0_i32 = arith.constant 0 : i32
    %c0_i32_0 = arith.constant 0 : i32
    %c0_i32_1 = arith.constant 0 : i32
    return %c0_i32, %c0_i32_0 : i32, i32
  }
  func.func @transform_4(%arg0: i32) -> (i32, i32) {
    %c0_i32 = arith.constant 0 : i32
    %c0_i32_0 = arith.constant 0 : i32
    %c0_i32_1 = arith.constant 0 : i32
    return %c0_i32, %c0_i32_0 : i32, i32
  }
  func.func @transform_5(%arg0: i32) -> (i32, i32) {
    %c0_i32 = arith.constant 0 : i32
    %c0_i32_0 = arith.constant 0 : i32
    return %arg0, %c0_i32 : i32, i32
  }
}

</mosaic_0001>

<llo_original>
// kernel: tpu_custom_call.1
$region0: #{tpu_custom_call.1}
  #allocation0 [shape = 'u32[]', space=smem, size = 0x4, offset = 0x4, fixed_abs, tag = 'smem constant byte address 0x4 - core index']
  #allocation1 [shape = 'u32[144,128]{1,0:T(1,128)}', space=vmem, size = 0x12000, scoped, tag = 'internal scratch']
  %s0 = inlined_call_operand.hbm [shape: f32[16,32], index: 0, kind: input, shape index: {}]
  %s1 = inlined_call_operand.hbm [shape: bf16[32,32], index: 1, kind: input, shape index: {}]
  %s2 = inlined_call_operand.vmem [shape: f32[1,32], index: 2, kind: input, shape index: {}]
  %s3 = inlined_call_operand.vmem [shape: f32[1,32], index: 3, kind: input, shape index: {}]
  %s4 = inlined_call_operand.vmem [shape: f32[1,32], index: 4, kind: input, shape index: {}]
  %s5 = inlined_call_operand.hbm [shape: f32[16,32], index: 5, kind: output, shape index: {}]
  %s6 = sld [smem:[#allocation0]]
  $region61: #{tpu_custom_call.1} parent=0
    _
  %s8 = ssub.s32 1, %s6
  %s9 = scalar_select 0, %s8, %s6
  $region1: #{tpu_custom_call.1} parent=0
    #allocation2 [shape = 'u8[8192]{0}', space=vmem, size = 0x2000, scoped, tag = 'input window, operand 0']
    #allocation3 [shape = 's32[2]{0}', space=sflag, size = 0x8, scoped, tag = 'scoped memory for tpu_custom_call.1']
    #allocation4 [shape = 's32[2]{0}', space=sflag, size = 0x8, scoped, tag = 'scoped memory for tpu_custom_call.1']
    #allocation5 [shape = 'u8[8192]{0}', space=vmem, size = 0x2000, scoped, tag = 'input window, operand 1, single buffered']
    #allocation6 [shape = 's32[1]{0}', space=sflag, size = 0x4, scoped, tag = 'scoped memory for tpu_custom_call.1']
    #allocation7 [shape = 'u8[8192]{0}', space=vmem, size = 0x2000, scoped, tag = 'output window, operand 0']
    %10 = vsyncpa [#allocation3], 0
    %s11 = scalar_lea.sflag [#allocation3], 1
    %12 = vsyncpa %s11, 0
    %13 = vsyncpa [#allocation6], 0
    %14 = vsyncpa [#allocation4], 0
    %s15 = scalar_lea.sflag [#allocation4], 1
    %16 = vsyncpa %s15, 0
    loop: start=0, step=1, limit=4
    $region2: #{tpu_custom_call.1} parent=1 // loop_pre_header
      _
    $region3: #{tpu_custom_call.1} parent=1 // loop_header
      %s18 = sphi 0, %s22
      %p19 = scmp.ge.s32.totalorder %s18, 4
      %s28 = sphi 0, %s30
      %s31 = sphi 0, %s28
      %s32 = sphi 0, %s31
      %s48 = sphi 0, %s32
      %s52 = sphi 0, %s52
      %s54 = sphi 0, %s52
      %s55 = sphi 0, %s54
      %s69 = sphi 0, %s55
      %s73 = sphi 0, %s73
      %s75 = sphi 0, %s73
      %s76 = sphi 0, %s75
      %s90 = sphi 0, %s76
      %s94 = sphi 0, %s94
      %s96 = sphi 0, %s94
      %s97 = sphi 0, %s96
      %s111 = sphi 0, %s97
      %s115 = sphi 0, %s115
      %s117 = sphi 0, %s115
      %s118 = sphi 0, %s117
      %s132 = sphi 0, %s118
      %s138 = sphi 0, %s140
      %s141 = sphi 0, %s138
      %s142 = sphi 0, %s141
      %s158 = sphi 0, %s142
    $region4: #{tpu_custom_call.1} parent=1 // loop_header_branch
      %21 = sbr.rel (%p19) target = $region8
    $region5: #{tpu_custom_call.1} parent=1 // loop_body
      %s23 = ssub.s32 %s18, 1
      %s24 = ssub.s32 %s18, 2
      %s25 = sadd.s32 %s18, 1
      %s26 = ssub.s32 %s18, %s25
      %p27 = scmp.eq.s32.totalorder %s26, 0
      %s29 = sadd.s32 %s28, 1
      %s30 = scalar_select %p27, %s28, %s29
      %p33 = pneg %p27
      %p34 = scmp.eq.s32.totalorder %s18, 1
      %p35 = por %p33, %p34
      %p36 = scmp.ne.s32.totalorder %s28, %s31
      %p37 = scmp.eq.s32.totalorder %s18, 0
      %p38 = por %p36, %p37
      %p39 = scmp.ne.s32.totalorder %s28, %s31
      %p40 = scmp.eq.s32.totalorder %s23, 1
      %p41 = por %p39, %p40
      %p42 = scmp.ne.s32.totalorder %s31, %s32
      %p43 = scmp.eq.s32.totalorder %s23, 0
      %p44 = por %p42, %p43
      %p45 = scmp.ne.s32.totalorder %s31, %s32
      %p46 = scmp.eq.s32.totalorder %s24, 1
      %p47 = por %p45, %p46
      %p49 = scmp.ne.s32.totalorder %s32, %s48
      %p50 = scmp.eq.s32.totalorder %s24, 0
      %p51 = por %p49, %p50
      %s53 = sadd.s32 %s52, 1
      %p56 = scmp.eq.s32.totalorder %s18, 1
      %p57 = scmp.ne.s32.totalorder %s52, %s54
      %p58 = scmp.eq.s32.totalorder %s18, 0
      %p59 = por %p57, %p58
      %p60 = scmp.ne.s32.totalorder %s52, %s54
      %p61 = scmp.eq.s32.totalorder %s23, 1
      %p62 = por %p60, %p61
      %p63 = scmp.ne.s32.totalorder %s54, %s55
      %p64 = scmp.eq.s32.totalorder %s23, 0
      %p65 = por %p63, %p64
      %p66 = scmp.ne.s32.totalorder %s54, %s55
      %p67 = scmp.eq.s32.totalorder %s24, 1
      %p68 = por %p66, %p67
      %p70 = scmp.ne.s32.totalorder %s55, %s69
      %p71 = scmp.eq.s32.totalorder %s24, 0
      %p72 = por %p70, %p71
      %s74 = sadd.s32 %s73, 1
      %p77 = scmp.eq.s32.totalorder %s18, 1
      %p78 = scmp.ne.s32.totalorder %s73, %s75
      %p79 = scmp.eq.s32.totalorder %s18, 0
      %p80 = por %p78, %p79
      %p81 = scmp.ne.s32.totalorder %s73, %s75
      %p82 = scmp.eq.s32.totalorder %s23, 1
      %p83 = por %p81, %p82
      %p84 = scmp.ne.s32.totalorder %s75, %s76
      %p85 = scmp.eq.s32.totalorder %s23, 0
      %p86 = por %p84, %p85
      %p87 = scmp.ne.s32.totalorder %s75, %s76
      %p88 = scmp.eq.s32.totalorder %s24, 1
      %p89 = por %p87, %p88
      %p91 = scmp.ne.s32.totalorder %s76, %s90
      %p92 = scmp.eq.s32.totalorder %s24, 0
      %p93 = por %p91, %p92
      %s95 = sadd.s32 %s94, 1
      %p98 = scmp.eq.s32.totalorder %s18, 1
      %p99 = scmp.ne.s32.totalorder %s94, %s96
      %p100 = scmp.eq.s32.totalorder %s18, 0
      %p101 = por %p99, %p100
      %p102 = scmp.ne.s32.totalorder %s94, %s96
      %p103 = scmp.eq.s32.totalorder %s23, 1
      %p104 = por %p102, %p103
      %p105 = scmp.ne.s32.totalorder %s96, %s97
      %p106 = scmp.eq.s32.totalorder %s23, 0
      %p107 = por %p105, %p106
      %p108 = scmp.ne.s32.totalorder %s96, %s97
      %p109 = scmp.eq.s32.totalorder %s24, 1
      %p110 = por %p108, %p109
      %p112 = scmp.ne.s32.totalorder %s97, %s111
      %p113 = scmp.eq.s32.totalorder %s24, 0
      %p114 = por %p112, %p113
      %s116 = sadd.s32 %s115, 1
      %p119 = scmp.eq.s32.totalorder %s18, 1
      %p120 = scmp.ne.s32.totalorder %s115, %s117
      %p121 = scmp.eq.s32.totalorder %s18, 0
      %p122 = por %p120, %p121
      %p123 = scmp.ne.s32.totalorder %s115, %s117
      %p124 = scmp.eq.s32.totalorder %s23, 1
      %p125 = por %p123, %p124
      %p126 = scmp.ne.s32.totalorder %s117, %s118
      %p127 = scmp.eq.s32.totalorder %s23, 0
      %p128 = por %p126, %p127
      %p129 = scmp.ne.s32.totalorder %s117, %s118
      %p130 = scmp.eq.s32.totalorder %s24, 1
      %p131 = por %p129, %p130
      %p133 = scmp.ne.s32.totalorder %s118, %s132
      %p134 = scmp.eq.s32.totalorder %s24, 0
      %p135 = por %p133, %p134
      %s136 = ssub.s32 %s18, %s25
      %p137 = scmp.eq.s32.totalorder %s136, 0
      %s139 = sadd.s32 %s138, 1
      %s140 = scalar_select %p137, %s138, %s139
      %p143 = pneg %p137
      %p144 = scmp.eq.s32.totalorder %s18, 1
      %p145 = por %p143, %p144
      %p146 = scmp.ne.s32.totalorder %s138, %s141
      %p147 = scmp.eq.s32.totalorder %s18, 0
      %p148 = por %p146, %p147
      %p149 = scmp.ne.s32.totalorder %s138, %s141
      %p150 = scmp.eq.s32.totalorder %s23, 1
      %p151 = por %p149, %p150
      %p152 = scmp.ne.s32.totalorder %s141, %s142
      %p153 = scmp.eq.s32.totalorder %s23, 0
      %p154 = por %p152, %p153
      %p155 = scmp.ne.s32.totalorder %s141, %s142
      %p156 = scmp.eq.s32.totalorder %s24, 1
      %p157 = por %p155, %p156
      %p159 = scmp.ne.s32.totalorder %s142, %s158
      %p160 = scmp.eq.s32.totalorder %s24, 0
      %p161 = por %p159, %p160
      %p162 = scmp.le.s32.totalorder 1, %s18
      %p163 = scmp.lt.s32.totalorder %s18, 3
      %p164 = pnand %p162, %p163
      %p165 = pneg %p164
      // Predicated region
      $region9: #{tpu_custom_call.1} parent=5 // pred_check
        _
      $region10: #{tpu_custom_call.1} parent=5 // pred_check_branch
        %167 = sbr.rel (%p164) target = $region12
      $region11: #{tpu_custom_call.1} parent=5 // pred_region
        %s168 = ssub.s32 %s18, 1
        // Predicated region
        $region13: #{tpu_custom_call.1} parent=11 // pred_check
          %p169 = pneg %p65
        $region14: #{tpu_custom_call.1} parent=11 // pred_check_branch
          %171 = sbr.rel (%p169) target = $region16
        $region15: #{tpu_custom_call.1} parent=11 // pred_region
          %s173 = ssub.s32 256, 256
          %174 = vsyncadd [#allocation6], %s173
          %s175 = sshll.u32 [#allocation5], 4
          %s176 = int_to_ptr.vmem [resolvable:$true] %s175
          %181 = dma.hbm_to_vmem [thread:$0]  %s1, 256, %s176, [#allocation6], 64, 64, 4
        $region16: #{tpu_custom_call.1} parent=11 // pred_fallthru
          _
        // Predicated region
        $region17: #{tpu_custom_call.1} parent=11 // pred_check
          %p182 = pneg %p86
        $region18: #{tpu_custom_call.1} parent=11 // pred_check_branch
          %184 = sbr.rel (%p182) target = $region20
        $region19: #{tpu_custom_call.1} parent=11 // pred_region
          _
        $region20: #{tpu_custom_call.1} parent=11 // pred_fallthru
          _
        // Predicated region
        $region21: #{tpu_custom_call.1} parent=11 // pred_check
          %p185 = pneg %p107
        $region22: #{tpu_custom_call.1} parent=11 // pred_check_branch
          %187 = sbr.rel (%p185) target = $region24
        $region23: #{tpu_custom_call.1} parent=11 // pred_region
          _
        $region24: #{tpu_custom_call.1} parent=11 // pred_fallthru
          _
        // Predicated region
        $region25: #{tpu_custom_call.1} parent=11 // pred_check
          %p188 = pneg %p128
        $region26: #{tpu_custom_call.1} parent=11 // pred_check_branch
          %190 = sbr.rel (%p188) target = $region28
        $region27: #{tpu_custom_call.1} parent=11 // pred_region
          _
        $region28: #{tpu_custom_call.1} parent=11 // pred_fallthru
          _
      $region12: #{tpu_custom_call.1} parent=5 // pred_fallthru
        _
      %p191 = scmp.lt.s32.totalorder %s18, 2
      // Predicated region
      $region29: #{tpu_custom_call.1} parent=5 // pred_check
        %p192 = pneg %p191
      $region30: #{tpu_custom_call.1} parent=5 // pred_check_branch
        %194 = sbr.rel (%p192) target = $region32
      $region31: #{tpu_custom_call.1} parent=5 // pred_region
        // Predicated region
        $region33: #{tpu_custom_call.1} parent=31 // pred_check
          %p195 = pneg %p38
        $region34: #{tpu_custom_call.1} parent=31 // pred_check_branch
          %197 = sbr.rel (%p195) target = $region36
        $region35: #{tpu_custom_call.1} parent=31 // pred_region
          %s198 = sand.u32 %s28, 1
          %s199 = scalar_lea.sflag [#allocation3], %s198
          %s200 = sand.u32 %s28, 1
          %s201 = smul.addr %s200, 8
          %s202 = scalar_lea.vmem [#allocation2], %s201
          %s204 = ssub.s32 128, 128
          %205 = vsyncadd %s199, %s204
          %s206 = smul.addr %s18, 128
          %s207 = scalar_lea.hbm %s0, %s206
          %s209 = sshll.u32 %s202, 4
          %s210 = int_to_ptr.vmem [resolvable:$true] %s209
          %212 = dma.hbm_to_vmem [thread:$0]  %s207, 128, %s210, %s199
        $region36: #{tpu_custom_call.1} parent=31 // pred_fallthru
          _
      $region32: #{tpu_custom_call.1} parent=5 // pred_fallthru
        _
      %p213 = scmp.le.s32.totalorder 1, %s18
      %p214 = scmp.lt.s32.totalorder %s18, 3
      %p215 = pnand %p213, %p214
      %p216 = pneg %p215
      // Predicated region
      $region37: #{tpu_custom_call.1} parent=5 // pred_check
        _
      $region38: #{tpu_custom_call.1} parent=5 // pred_check_branch
        %218 = sbr.rel (%p215) target = $region40
      $region39: #{tpu_custom_call.1} parent=5 // pred_region
        %s219 = ssub.s32 %s18, 1
        %s220 = sand.u32 %s31, 1
        %s221 = scalar_lea.sflag [#allocation3], %s220
        %s222 = sand.u32 %s31, 1
        %s223 = smul.addr %s222, 8
        %s224 = scalar_lea.vmem [#allocation2], %s223
        // Predicated region
        $region41: #{tpu_custom_call.1} parent=39 // pred_check
          %p225 = pneg %p44
        $region42: #{tpu_custom_call.1} parent=39 // pred_check_branch
          %227 = sbr.rel (%p225) target = $region44
        $region43: #{tpu_custom_call.1} parent=39 // pred_region
          %228 = dma.done %s221, 128
        $region44: #{tpu_custom_call.1} parent=39 // pred_fallthru
          _
        // Predicated region
        $region45: #{tpu_custom_call.1} parent=39 // pred_check
          %p229 = pneg %p65
        $region46: #{tpu_custom_call.1} parent=39 // pred_check_branch
          %231 = sbr.rel (%p229) target = $region48
        $region47: #{tpu_custom_call.1} parent=39 // pred_region
          %232 = dma.done [#allocation6], 256
        $region48: #{tpu_custom_call.1} parent=39 // pred_fallthru
          _
        %s233 = sand.u32 %s31, 1
        %s234 = scalar_lea.sflag [#allocation3], %s233
        %s235 = sand.u32 %s31, 1
        %s236 = smul.addr %s235, 8
        %s237 = scalar_lea.vmem [#allocation2], %s236
        %p238 = pneg %p44
        %p239 = pneg %p41
        %p240 = pneg %p65
        %p241 = pneg %p62
        %p242 = pneg %p86
        %p243 = pneg %p83
        %p244 = pneg %p107
        %p245 = pneg %p104
        %p246 = pneg %p128
        %p247 = pneg %p125
        %p248 = pneg %p154
        %p249 = pneg %p151
        %s250 = sand.u32 %s141, 1
        %s251 = scalar_lea.sflag [#allocation4], %s250
        %s252 = sand.u32 %s141, 1
        %s253 = smul.addr %s252, 8
        %s254 = scalar_lea.vmem [#allocation7], %s253
        %v256 = vld [vmem:[%s224] sm:$0xff]
        %v257 = vpack.c.bf16 %v256, %v256
        %v258 = vld [vmem:[#allocation5] sm:$0xf]
        %v259 = vld [vmem:[#allocation5 + $0x4] sm:$0xf]
        %v260 = vld [vmem:[#allocation5 + $0x8] sm:$0xf]
        %v261 = vld [vmem:[#allocation5 + $0xc] sm:$0xf]
        %v262 = vld [vmem:[%s2] sm:$0x1]
        %v264 = vlaneseq
        %v265 = vshrl.u32 %v264, 7
        %v266 = vsub.s32 0, %v265
        %v267 = vrot.slane %v262, %v266
        %v273 = vunpack.c.l.b16 %v258
        %v274 = vunpack.c.l.b16 %v259
        %v275 = vunpack.c.l.b16 %v260
        %v276 = vunpack.c.l.b16 %v261
        %v277 = vpack.c.b16 %v274, %v273
        %v278 = vpack.c.b16 %v276, %v275
        %vm281 = vcmask 261120
        %v283 = vsel %vm281, %v257, 0
        %285 = vmatprep.subr.bf16.mxu0 0
        %286 = vmatpush1.bf16.msra.mxu0 0
        %287 = vmatprep.subr.bf16.mxu0 0
        %288 = vmatpush1.bf16.msra.mxu0 0
        %289 = vmatprep.subr.bf16.mxu0 0
        %290 = vmatpush1.bf16.msra.mxu0 0
        %291 = vmatprep.subr.bf16.mxu0 0
        %292 = vmatpush1.bf16.msra.mxu0 0
        %293 = vmatprep.subr.bf16.mxu0 0
        %294 = vmatpush1.bf16.msra.mxu0 0
        %295 = vmatprep.subr.bf16.mxu0 0
        %296 = vmatpush1.bf16.msra.mxu0 0
        %297 = vmatprep.subr.bf16.mxu0 0
        %298 = vmatpush1.bf16.msra.mxu0 %v278
        %299 = vmatprep.subr.bf16.mxu0 0
        %300 = vmatpush1.bf16.msra.mxu0 %v277
        %301 = vmatprep.subr.bf16.mxu0 0
        %302 = vmatpush2.bf16.msra.mxu0 0
        %303 = vmatprep.subr.bf16.mxu0 0
        %304 = vmatpush2.bf16.msra.mxu0 0
        %305 = vmatprep.subr.bf16.mxu0 0
        %306 = vmatpush2.bf16.msra.mxu0 0
        %307 = vmatprep.subr.bf16.mxu0 0
        %308 = vmatpush2.bf16.msra.mxu0 0
        %309 = vmatprep.subr.bf16.mxu0 0
        %310 = vmatpush2.bf16.msra.mxu0 0
        %311 = vmatprep.subr.bf16.mxu0 0
        %312 = vmatpush2.bf16.msra.mxu0 0
        %313 = vmatprep.subr.bf16.mxu0 0
        %314 = vmatpush2.bf16.msra.mxu0 0
        %315 = vmatprep.subr.bf16.mxu0 0
        %316 = vmatpush2.bf16.msra.mxu0 0
        %317 = vmatprep.mubr.bf16.mxu0 0
        %318 = vmatmul.mubr.bf16.gmra.mxu0 %v283
        %v319 = vpop.f32.mrf.mxu0
        %v320 = vadd.f32 %v267, %v319
        %v321 = vpop.f32.mrf.mxu0
        %v322 = vpop.f32.mrf.mxu0
        %v323 = vpop.f32.mrf.mxu0
        %324 = vdwg.mxu0
        %v325 = vld [vmem:[%s3] sm:$0x1]
        %v326 = vld [vmem:[%s4] sm:$0x1]
        %v327 = vmul.f32 %v320, 0.5
        %v328 = vmul.f32 %v320, 0.70710677
        %v329 = verf.f32.pop %v328
        %v330 = vadd.f32 %v329, 1.0
        %v331 = vmul.f32 %v327, %v330
        %v332 = vsel %vm281, %v331, 0.0
        %333 = vadd.xlane.f32.xlu0 %v332
        %v334 = vpop.xlane.xlu0 %333
        %v335 = vrcp.pop 32.0
        %v336 = vmul.f32 %v334, %v335
        %v337 = vsub.f32 %v331, %v336
        %v338 = vmul.f32 %v337, %v337
        %v339 = vsel %vm281, %v338, 0.0
        %340 = vadd.xlane.f32.xlu0 %v339
        %v341 = vpop.xlane.xlu0 %340
        %v342 = vmul.f32 %v341, %v335
        %v343 = vadd.f32 %v342, 1e-12
        %v344 = vrsqrt.pop %v343
        %v345 = vmul.f32 %v337, %v344
        %v347 = vlaneseq
        %v348 = vshrl.u32 %v347, 7
        %v349 = vsub.s32 0, %v348
        %v350 = vrot.slane %v325, %v349
        %v352 = vmul.f32 %v350, %v345
        %v354 = vlaneseq
        %v355 = vshrl.u32 %v354, 7
        %v356 = vsub.s32 0, %v355
        %v357 = vrot.slane %v326, %v356
        %v359 = vadd.f32 %v352, %v357
        %360 = vst.msk [vmem:[%s254] sm:$0xff] %vm281, %v359
        %s361 = sand.u32 %s141, 1
        %s362 = scalar_lea.sflag [#allocation4], %s361
        %s363 = sand.u32 %s141, 1
        %s364 = smul.addr %s363, 8
        %s365 = scalar_lea.vmem [#allocation7], %s364
        // Predicated region
        $region49: #{tpu_custom_call.1} parent=39 // pred_check
          %p366 = pneg %p151
        $region50: #{tpu_custom_call.1} parent=39 // pred_check_branch
          %368 = sbr.rel (%p366) target = $region52
        $region51: #{tpu_custom_call.1} parent=39 // pred_region
          %s370 = ssub.s32 128, 128
          %371 = vsyncadd %s362, %s370
          %s372 = smul.addr %s23, 128
          %s373 = scalar_lea.hbm %s5, %s372
          %s375 = sshll.u32 %s365, 4
          %s376 = int_to_ptr.vmem [resolvable:$true] %s375
          %378 = dma.vmem_to_hbm [thread:$0]  %s376, 128, %s373, %s362
        $region52: #{tpu_custom_call.1} parent=39 // pred_fallthru
          _
      $region40: #{tpu_custom_call.1} parent=5 // pred_fallthru
        _
      %p379 = scmp.le.s32.totalorder 2, %s18
      // Predicated region
      $region53: #{tpu_custom_call.1} parent=5 // pred_check
        %p380 = pneg %p379
      $region54: #{tpu_custom_call.1} parent=5 // pred_check_branch
        %382 = sbr.rel (%p380) target = $region56
      $region55: #{tpu_custom_call.1} parent=5 // pred_region
        %s383 = ssub.s32 %s18, 2
        // Predicated region
        $region57: #{tpu_custom_call.1} parent=55 // pred_check
          %p384 = pneg %p157
        $region58: #{tpu_custom_call.1} parent=55 // pred_check_branch
          %386 = sbr.rel (%p384) target = $region60
        $region59: #{tpu_custom_call.1} parent=55 // pred_region
          %s387 = sand.u32 %s142, 1
          %s388 = scalar_lea.sflag [#allocation4], %s387
          %s389 = sand.u32 %s142, 1
          %s390 = smul.addr %s389, 8
          %s391 = scalar_lea.vmem [#allocation7], %s390
          %392 = dma.done %s388, 128
        $region60: #{tpu_custom_call.1} parent=55 // pred_fallthru
          _
      $region56: #{tpu_custom_call.1} parent=5 // pred_fallthru
        _
    $region6: #{tpu_custom_call.1} parent=1 // loop_footer
      %s22 = sadd.s32 1, %s18
    $region7: #{tpu_custom_call.1} parent=1 // loop_footer_branch
      %17 = sbr.rel target = $region3
    $region8: #{tpu_custom_call.1} parent=1 // loop_exit
      _
    %393 = vsyncpa [#allocation3], 1
    %s394 = scalar_lea.sflag [#allocation3], 1
    %395 = vsyncpa %s394, 1
    %396 = vsyncpa [#allocation6], 1
    %397 = vsyncpa [#allocation4], 1
    %s398 = scalar_lea.sflag [#allocation4], 1
    %399 = vsyncpa %s398, 1

</llo_original>
